<compile_context>
chip_gen: v7x
topology: tpu7x:2x2x1
jax: 0.10.0
libtpu: 0.0.40
codegen_flags: <defaults>
</compile_context>

<pallas_src>
import math

import jax
import jax.numpy as jnp
from jax.experimental import pallas as pl
from jax.experimental.pallas import tpu as pltpu


# ----------------------------- kernels ---------------------------------------

def _ffn_kernel_resident(x_ref, w1t_ref, b1_ref, w2t_ref, b2_ref, out_ref):
    """Weights fully resident in VMEM; grid iterates over row tiles only."""
    h = jnp.dot(x_ref[...], w1t_ref[...], preferred_element_type=jnp.float32)
    h = jnp.maximum(h + b1_ref[...], 0.0)            # bias + ReLU in f32 (VPU)
    # TODO(synk): dropout omitted (identity — inference / eval mode).
    y = jnp.dot(h.astype(w2t_ref.dtype), w2t_ref[...],
                preferred_element_type=jnp.float32)
    out_ref[...] = (y + b2_ref[...]).astype(out_ref.dtype)


def _ffn_kernel_chunked(x_ref, w1t_ref, b1_ref, w2t_ref, b2_ref, out_ref,
                        acc_ref):
    """Hidden dim chunked on an 'arbitrary' reduction axis; f32 accumulator."""
    k = pl.program_id(1)

    @pl.when(k == 0)
    def _():
        acc_ref[...] = jnp.zeros_like(acc_ref)

    # fc1 chunk: (TM, E) @ (E, TK) -> (TM, TK), f32 accumulation on the MXU.
    h = jnp.dot(x_ref[...], w1t_ref[...], preferred_element_type=jnp.float32)
    h = jnp.maximum(h + b1_ref[...], 0.0)
    # TODO(synk): dropout omitted (identity — inference / eval mode).

    # fc2 partial contraction over this hidden chunk, accumulated in f32.
    acc_ref[...] += jnp.dot(h.astype(w2t_ref.dtype), w2t_ref[...],
                            preferred_element_type=jnp.float32)

    @pl.when(k == pl.num_programs(1) - 1)
    def _():
        out_ref[...] = (acc_ref[...] + b2_ref[...]).astype(out_ref.dtype)


# ------------------------- planning / VMEM budgeting -------------------------

_DEFAULT_VMEM_CAP = 64 << 20   # conservative: v7x per-TC VMEM


def _vmem_capacity_bytes():
    try:
        cap = int(pltpu.get_tpu_info().vmem_capacity_bytes)
        if cap > 0:
            return cap
    except Exception:
        pass
    return _DEFAULT_VMEM_CAP


def _resident_bytes(tm, E, HID, in_is, out_is):
    return (2 * tm * E * in_is        # x tile (double buffered)
            + E * HID * in_is         # W1^T (resident, fetched once)
            + HID * E * in_is         # W2^T (resident)
            + 2 * tm * E * out_is     # output tile (double buffered)
            + 2 * tm * HID * 4        # (TM, HID) f32 intermediate headroom
            + tm * E * 4              # f32 epilogue temp
            + 8 * (HID + E))          # biases (f32)


def _chunked_bytes(tm, tk, E, in_is, out_is):
    return (2 * tm * E * in_is        # x tile
            + 2 * E * tk * in_is      # W1^T chunk
            + 2 * tk * E * in_is      # W2^T chunk
            + 2 * tm * E * out_is     # output tile
            + tm * E * 4              # f32 accumulator scratch
            + 2 * tm * tk * 4         # f32 fc1 intermediate headroom
            + 8 * (tk + E))           # biases


def _row_tile_candidates(M):
    if M <= 128:
        return [M]                    # full-dim block (no padding needed)
    cap = pl.cdiv(M, 128) * 128
    cands = [t for t in (512, 256, 128) if t <= cap]
    return cands or [128]


def _prefer_two_row_tiles(M, tm):
    # v7x has 2 TCs; keep >= 2 tiles on the "parallel" axis when possible.
    while tm > 128 and pl.cdiv(M, tm) < 2:
        tm //= 2
    return tm


def _plan(M, E, HID, in_is, out_is, budget):
    tm_cands = _row_tile_candidates(M)

    # 1) Resident-weight mode: weights DMA'd once, no hidden-dim grid axis.
    for tm in tm_cands:
        if _resident_bytes(tm, E, HID, in_is, out_is) <= budget:
            return "resident", _prefer_two_row_tiles(M, tm), None

    # 2) Chunked mode: hidden dim split across an "arbitrary" reduction axis.
    tk_cands = [t for t in (512, 256, 128) if HID % t == 0] or [HID]
    for tm in tm_cands:
        for tk in tk_cands:
            if _chunked_bytes(tm, tk, E, in_is, out_is) <= budget:
                return "chunked", _prefer_two_row_tiles(M, tm), tk

    # 3) Best effort: smallest tiles (vmem_limit_bytes raised accordingly).
    return "chunked", _prefer_two_row_tiles(M, tm_cands[-1]), tk_cands[-1]


# ------------------------------- wrappers -------------------------------------

def prepare_ffn_params(w1, b1, w2, b2, compute_dtype=jnp.bfloat16):
    """One-time weight prep (transpose + cast ONCE, reuse across forwards).

    PyTorch nn.Linear layout: w1 (HID, E), b1 (HID,), w2 (E, HID), b2 (E,).
    """
    # TODO(synk): optional int8 (v6e) / fp8 (v7x) weight quantization with
    # per-channel scales would halve weight HBM traffic; not implemented here.
    w1t = jnp.transpose(w1).astype(compute_dtype)        # (E, HID)
    w2t = jnp.transpose(w2).astype(compute_dtype)        # (HID, E)
    b1r = jnp.reshape(b1, (1, -1)).astype(jnp.float32)   # (1, HID)
    b2r = jnp.reshape(b2, (1, -1)).astype(jnp.float32)   # (1, E)
    return w1t, b1r, w2t, b2r


def feed_forward_prepared(x, w1t, b1r, w2t, b2r, *, out_dtype=None):
    """Position-wise FFN forward using pre-prepared (transposed) weights."""
    orig_shape = x.shape
    E = orig_shape[-1]
    HID = w1t.shape[1]
    assert w1t.shape == (E, HID) and w2t.shape == (HID, E)
    M = math.prod(orig_shape[:-1])
    compute_dtype = w1t.dtype
    out_dtype = x.dtype if out_dtype is None else out_dtype

    in_is = jnp.dtype(compute_dtype).itemsize
    out_is = jnp.dtype(out_dtype).itemsize

    vmem_cap = _vmem_capacity_bytes()
    budget = int(0.75 * vmem_cap)
    mode, TM, TK = _plan(M, E, HID, in_is, out_is, budget)

    # Flatten rows, pad M up to a multiple of TM (keeps 128-multiple tiles
    # for ragged batch*seq instead of a single giant fallback block).
    x2 = jnp.reshape(x, (M, E)).astype(compute_dtype)
    Mpad = pl.cdiv(M, TM) * TM
    if Mpad != M:
        x2 = jnp.pad(x2, ((0, Mpad - M), (0, 0)))
    grid_i = Mpad // TM

    if mode == "resident":
        needed = _resident_bytes(TM, E, HID, in_is, out_is)
        grid = (grid_i,)
        in_specs = [
            pl.BlockSpec((TM, E), lambda i: (i, 0)),     # x rows
            pl.BlockSpec((E, HID), lambda i: (0, 0)),    # W1^T (fetched once)
            pl.BlockSpec((1, HID), lambda i: (0, 0)),    # b1
            pl.BlockSpec((HID, E), lambda i: (0, 0)),    # W2^T (fetched once)
            pl.BlockSpec((1, E), lambda i: (0, 0)),      # b2
        ]
        out_specs = pl.BlockSpec((TM, E), lambda i: (i, 0))
        scratch_shapes = []
        kernel = _ffn_kernel_resident
        dim_sem = ("parallel",)
        weight_reads = 1
    else:
        needed = _chunked_bytes(TM, TK, E, in_is, out_is)
        grid = (grid_i, HID // TK)
        in_specs = [
            pl.BlockSpec((TM, E), lambda i, k: (i, 0)),  # x rows
            pl.BlockSpec((E, TK), lambda i, k: (0, k)),  # W1^T hidden chunk
            pl.BlockSpec((1, TK), lambda i, k: (0, k)),  # b1 hidden chunk
            pl.BlockSpec((TK, E), lambda i, k: (k, 0)),  # W2^T hidden chunk
            pl.BlockSpec((1, E), lambda i, k: (0, 0)),   # b2
        ]
        out_specs = pl.BlockSpec((TM, E), lambda i, k: (i, 0))
        scratch_shapes = [pltpu.VMEM((TM, E), jnp.float32)]
        kernel = _ffn_kernel_chunked
        dim_sem = ("parallel", "arbitrary")
        weight_reads = grid_i
        # TODO(synk): sweep pipeline_mode=pl.Buffered(3) on the weight specs
        # when DMA is exposed on the k axis (small TM / large weights).

    # Raise the scoped-VMEM limit to cover the actual footprint (+ headroom),
    # clamped to the device capacity.
    vmem_limit = int(min(0.9 * vmem_cap, max(2 * needed, 32 << 20)))
    vmem_limit = int(min(max(vmem_limit, needed), vmem_cap))

    cost = pl.CostEstimate(
        flops=4 * Mpad * E * HID,                       # two matmuls
        transcendentals=0,
        bytes_accessed=int(Mpad * E * in_is             # x in
                           + weight_reads * 2 * E * HID * in_is  # W1, W2
                           + Mpad * E * out_is          # y out
                           + 4 * (HID + E)),            # biases (f32)
    )

    out2 = pl.pallas_call(
        kernel,
        out_shape=jax.ShapeDtypeStruct((Mpad, E), out_dtype),
        grid_spec=pltpu.PrefetchScalarGridSpec(
            num_scalar_prefetch=0,
            grid=grid,
            in_specs=in_specs,
            out_specs=out_specs,
            scratch_shapes=scratch_shapes,
        ),
        compiler_params=pltpu.CompilerParams(
            dimension_semantics=dim_sem,
            vmem_limit_bytes=vmem_limit,
        ),
        cost_estimate=cost,
    )(x2, w1t, b1r, w2t, b2r)

    if Mpad != M:
        out2 = out2[:M]
    return jnp.reshape(out2, orig_shape)


def feed_forward(x, w1, b1, w2, b2, *, compute_dtype=jnp.bfloat16,
                 out_dtype=None):
    """Convenience wrapper (re-prepares weights; prefer prepare_ffn_params +
    feed_forward_prepared when weights are static across calls)."""
    params = prepare_ffn_params(w1, b1, w2, b2, compute_dtype)
    return feed_forward_prepared(x, *params, out_dtype=out_dtype)


# ---------------- pure-JAX reference (for validation) ----------------

def feed_forward_ref(x, w1, b1, w2, b2):
    h = jnp.maximum(x @ w1.T + b1, 0.0)
    return h @ w2.T + b2


if __name__ == "__main__":
    N, S, E, HID = 2, 8, 32, 64

    key = jax.random.PRNGKey(0)
    k_x, k_w1, k_b1, k_w2, k_b2 = jax.random.split(key, 5)

    x = jax.random.normal(k_x, (N, S, E), dtype=jnp.float32)
    w1 = (0.1 * jax.random.normal(k_w1, (HID, E))).astype(jnp.float32)
    b1 = (0.1 * jax.random.normal(k_b1, (HID,))).astype(jnp.float32)
    w2 = (0.1 * jax.random.normal(k_w2, (E, HID))).astype(jnp.float32)
    b2 = (0.1 * jax.random.normal(k_b2, (E,))).astype(jnp.float32)

    ref = feed_forward_ref(x, w1, b1, w2, b2)

    # One-time weight preparation (f32 MXU path -> tight tolerance).
    params_f32 = prepare_ffn_params(w1, b1, w2, b2, compute_dtype=jnp.float32)
    out_f32 = jax.block_until_ready(feed_forward_prepared(x, *params_f32))
    assert out_f32.shape == (N, S, E)
    assert jnp.allclose(out_f32, ref, rtol=1e-5, atol=1e-5), "f32 mismatch"

    # bf16 MXU inputs with f32 accumulation -> loose tolerance.
    params_bf16 = prepare_ffn_params(w1, b1, w2, b2, compute_dtype=jnp.bfloat16)
    out_bf16 = jax.block_until_ready(feed_forward_prepared(x, *params_bf16))
    assert out_bf16.shape == (N, S, E)
    assert jnp.allclose(out_bf16, ref, rtol=2e-2, atol=2e-2), "bf16 mismatch"

    # Ragged row count (M = 3*50 = 150 > 128) exercises row padding + a
    # multi-tile parallel grid; result must still match the reference.
    x_r = jax.random.normal(jax.random.PRNGKey(1), (3, 50, E), dtype=jnp.float32)
    ref_r = feed_forward_ref(x_r, w1, b1, w2, b2)
    out_r = jax.block_until_ready(feed_forward_prepared(x_r, *params_f32))
    assert out_r.shape == (3, 50, E)
    assert jnp.allclose(out_r, ref_r, rtol=1e-5, atol=1e-5), "ragged mismatch"

    print("KERNEL_OK")
</pallas_src>

<mosaic_0001>
module attributes {stable_mosaic.version = 11 : i64} {
  func.func @_ffn_kernel_resident(%arg0: i32, %arg1: memref<16x32xf32, #tpu.memory_space<vmem>>, %arg2: memref<32x64xf32, #tpu.memory_space<vmem>>, %arg3: memref<1x64xf32, #tpu.memory_space<vmem>>, %arg4: memref<64x32xf32, #tpu.memory_space<vmem>>, %arg5: memref<1x32xf32, #tpu.memory_space<vmem>>, %arg6: memref<16x32xf32, #tpu.memory_space<vmem>>) attributes {dimension_semantics = [#tpu.dimension_semantics<parallel>], iteration_bounds = array<i64: 1>, scalar_prefetch = 0 : i64, scratch_operands = 0 : i64, tpu.core_type = #tpu.core_type<tc>, window_params = [{transform_indices = @transform_0, window_bounds = array<i64: 16, 32>}, {pipeline_mode = #tpu.pipeline_mode<synchronous>, transform_indices = @transform_1, window_bounds = array<i64: 32, 64>}, {pipeline_mode = #tpu.pipeline_mode<synchronous>, transform_indices = @transform_2, window_bounds = array<i64: 1, 64>}, {pipeline_mode = #tpu.pipeline_mode<synchronous>, transform_indices = @transform_3, window_bounds = array<i64: 64, 32>}, {pipeline_mode = #tpu.pipeline_mode<synchronous>, transform_indices = @transform_4, window_bounds = array<i64: 1, 32>}, {transform_indices = @transform_5, window_bounds = array<i64: 16, 32>}]} {
    %c0 = arith.constant 0 : index
    %c0_0 = arith.constant 0 : index
    %0 = vector.load %arg1[%c0, %c0_0] : memref<16x32xf32, #tpu.memory_space<vmem>>, vector<16x32xf32>
    %c0_1 = arith.constant 0 : index
    %c0_2 = arith.constant 0 : index
    %1 = vector.load %arg2[%c0_1, %c0_2] : memref<32x64xf32, #tpu.memory_space<vmem>>, vector<32x64xf32>
    %cst = arith.constant dense<0.000000e+00> : vector<16x64xf32>
    %2 = tpu.matmul %0, %1, %cst {dimension_numbers = #tpu.dot_dimension_numbers<[1], [0], [0], [1], [0, 0, 1, 1], [], []>} : vector<16x32xf32>, vector<32x64xf32>, vector<16x64xf32> -> vector<16x64xf32>
    %c0_3 = arith.constant 0 : index
    %c0_4 = arith.constant 0 : index
    %3 = vector.load %arg3[%c0_3, %c0_4] : memref<1x64xf32, #tpu.memory_space<vmem>>, vector<1x64xf32>
    %4 = vector.broadcast %3 : vector<1x64xf32> to vector<16x64xf32>
    %5 = arith.addf %2, %4 : vector<16x64xf32>
    %cst_5 = arith.constant 0.000000e+00 : f32
    %6 = vector.broadcast %cst_5 : f32 to vector<16x64xf32>
    %7 = arith.maximumf %5, %6 : vector<16x64xf32>
    %c0_6 = arith.constant 0 : index
    %c0_7 = arith.constant 0 : index
    %8 = vector.load %arg4[%c0_6, %c0_7] : memref<64x32xf32, #tpu.memory_space<vmem>>, vector<64x32xf32>
    %cst_8 = arith.constant dense<0.000000e+00> : vector<16x32xf32>
    %9 = tpu.matmul %7, %8, %cst_8 {dimension_numbers = #tpu.dot_dimension_numbers<[1], [0], [0], [1], [0, 0, 1, 1], [], []>} : vector<16x64xf32>, vector<64x32xf32>, vector<16x32xf32> -> vector<16x32xf32>
    %c0_9 = arith.constant 0 : index
    %c0_10 = arith.constant 0 : index
    %10 = vector.load %arg5[%c0_9, %c0_10] : memref<1x32xf32, #tpu.memory_space<vmem>>, vector<1x32xf32>
    %11 = vector.broadcast %10 : vector<1x32xf32> to vector<16x32xf32>
    %12 = arith.addf %9, %11 : vector<16x32xf32>
    %c0_11 = arith.constant 0 : index
    %c0_12 = arith.constant 0 : index
    %13 = vector.load %arg6[%c0_11, %c0_12] : memref<16x32xf32, #tpu.memory_space<vmem>>, vector<16x32xf32>
    tpu.vector_store %arg6[%c0_11, %c0_12], %12 {strides = array<i32>} : memref<16x32xf32, #tpu.memory_space<vmem>>, vector<16x32xf32>,
    return
  }
  func.func @transform_0(%arg0: i32) -> (i32, i32) {
    %c0_i32 = arith.constant 0 : i32
    %c0_i32_0 = arith.constant 0 : i32
    return %arg0, %c0_i32 : i32, i32
  }
  func.func @transform_1(%arg0: i32) -> (i32, i32) {
    %c0_i32 = arith.constant 0 : i32
    %c0_i32_0 = arith.constant 0 : i32
    %c0_i32_1 = arith.constant 0 : i32
    return %c0_i32, %c0_i32_0 : i32, i32
  }
  func.func @transform_2(%arg0: i32) -> (i32, i32) {
    %c0_i32 = arith.constant 0 : i32
    %c0_i32_0 = arith.constant 0 : i32
    %c0_i32_1 = arith.constant 0 : i32
    return %c0_i32, %c0_i32_0 : i32, i32
  }
  func.func @transform_3(%arg0: i32) -> (i32, i32) {
    %c0_i32 = arith.constant 0 : i32
    %c0_i32_0 = arith.constant 0 : i32
    %c0_i32_1 = arith.constant 0 : i32
    return %c0_i32, %c0_i32_0 : i32, i32
  }
  func.func @transform_4(%arg0: i32) -> (i32, i32) {
    %c0_i32 = arith.constant 0 : i32
    %c0_i32_0 = arith.constant 0 : i32
    %c0_i32_1 = arith.constant 0 : i32
    return %c0_i32, %c0_i32_0 : i32, i32
  }
  func.func @transform_5(%arg0: i32) -> (i32, i32) {
    %c0_i32 = arith.constant 0 : i32
    %c0_i32_0 = arith.constant 0 : i32
    return %arg0, %c0_i32 : i32, i32
  }
}

</mosaic_0001>

<llo_original>
// kernel: tpu_custom_call.1
$region0: #{tpu_custom_call.1}
  #allocation0 [shape = 'u32[]', space=smem, size = 0x4, offset = 0x4, fixed_abs, tag = 'smem constant byte address 0x4 - core index']
  #allocation1 [shape = 'u32[144,128]{1,0:T(1,128)}', space=vmem, size = 0x12000, scoped, tag = 'internal scratch']
  %s0 = inlined_call_operand.vmem [shape: f32[16,32], index: 0, kind: input, shape index: {}]
  %s1 = inlined_call_operand.vmem [shape: f32[32,64], index: 1, kind: input, shape index: {}]
  %s2 = inlined_call_operand.vmem [shape: f32[1,64], index: 2, kind: input, shape index: {}]
  %s3 = inlined_call_operand.vmem [shape: f32[64,32], index: 3, kind: input, shape index: {}]
  %s4 = inlined_call_operand.vmem [shape: f32[1,32], index: 4, kind: input, shape index: {}]
  %s5 = inlined_call_operand.hbm [shape: f32[16,32], index: 5, kind: output, shape index: {}]
  %s6 = sld [smem:[#allocation0]]
  $region30: #{tpu_custom_call.1} parent=0
    _
  %s8 = ssub.s32 1, %s6
  %s9 = scalar_select 0, %s8, %s6
  $region1: #{tpu_custom_call.1} parent=0
    #allocation2 [shape = 'u8[8192]{0}', space=vmem, size = 0x2000, scoped, tag = 'output window, operand 0, single buffered']
    #allocation3 [shape = 's32[1]{0}', space=sflag, size = 0x4, scoped, tag = 'scoped memory for tpu_custom_call.1']
    %10 = vsyncpa [#allocation3], 0
    // Predicated region
    $region2: #{tpu_custom_call.1} parent=1 // pred_check
      _
    $region3: #{tpu_custom_call.1} parent=1 // pred_check_branch
      %12 = sbr.rel (0) target = $region5
    $region4: #{tpu_custom_call.1} parent=1 // pred_region
      _
    $region5: #{tpu_custom_call.1} parent=1 // pred_fallthru
      _
    // Predicated region
    $region6: #{tpu_custom_call.1} parent=1 // pred_check
      _
    $region7: #{tpu_custom_call.1} parent=1 // pred_check_branch
      %14 = sbr.rel (0) target = $region9
    $region8: #{tpu_custom_call.1} parent=1 // pred_region
      _
    $region9: #{tpu_custom_call.1} parent=1 // pred_fallthru
      _
    // Predicated region
    $region10: #{tpu_custom_call.1} parent=1 // pred_check
      _
    $region11: #{tpu_custom_call.1} parent=1 // pred_check_branch
      %16 = sbr.rel (0) target = $region13
    $region12: #{tpu_custom_call.1} parent=1 // pred_region
      _
    $region13: #{tpu_custom_call.1} parent=1 // pred_fallthru
      _
    // Predicated region
    $region14: #{tpu_custom_call.1} parent=1 // pred_check
      _
    $region15: #{tpu_custom_call.1} parent=1 // pred_check_branch
      %18 = sbr.rel (0) target = $region17
    $region16: #{tpu_custom_call.1} parent=1 // pred_region
      _
    $region17: #{tpu_custom_call.1} parent=1 // pred_fallthru
      _
    // Predicated region
    $region18: #{tpu_custom_call.1} parent=1 // pred_check
      _
    $region19: #{tpu_custom_call.1} parent=1 // pred_check_branch
      %20 = sbr.rel (0) target = $region21
    $region20: #{tpu_custom_call.1} parent=1 // pred_region
      _
    $region21: #{tpu_custom_call.1} parent=1 // pred_fallthru
      _
    %v21 = vld [vmem:[%s0] sm:$0xff]
    %v22 = vld [vmem:[%s0 + $0x8] sm:$0xff]
    %v23 = vld [vmem:[%s1] sm:$0xff]
    %v24 = vld [vmem:[%s1 + $0x8] sm:$0xff]
    %v25 = vld [vmem:[%s1 + $0x10] sm:$0xff]
    %v26 = vld [vmem:[%s1 + $0x18] sm:$0xff]
    %v27 = vld [vmem:[%s2] sm:$0x1]
    %v29 = vlaneseq
    %v30 = vshrl.u32 %v29, 7
    %v31 = vsub.s32 0, %v30
    %v32 = vrot.slane %v27, %v31
    %vm34 = vcmask 261120
    %v36 = vsel %vm34, %v21, 0
    %v39 = vsel %vm34, %v22, 0
    %41 = vmatprep.subr.mxu0 0.0
    %42 = vmatpush1.msra.mxu0 %v23
    %43 = vmatprep.subr.mxu0 0.0
    %44 = vmatpush1.msra.mxu0 %v24
    %45 = vmatprep.subr.mxu0 0.0
    %46 = vmatpush1.msra.mxu0 %v25
    %47 = vmatprep.subr.mxu0 0.0
    %48 = vmatpush1.msra.mxu0 %v26
    %49 = vmatprep.subr.mxu0 0.0
    %50 = vmatpush1.msra.mxu0 0.0
    %51 = vmatprep.subr.mxu0 0.0
    %52 = vmatpush1.msra.mxu0 0.0
    %53 = vmatprep.subr.mxu0 0.0
    %54 = vmatpush1.msra.mxu0 0.0
    %55 = vmatprep.subr.mxu0 0.0
    %56 = vmatpush1.msra.mxu0 0.0
    %57 = vmatprep.subr.mxu0 0.0
    %58 = vmatpush1.msra.mxu0 0.0
    %59 = vmatprep.subr.mxu0 0.0
    %60 = vmatpush1.msra.mxu0 0.0
    %61 = vmatprep.subr.mxu0 0.0
    %62 = vmatpush1.msra.mxu0 0.0
    %63 = vmatprep.subr.mxu0 0.0
    %64 = vmatpush1.msra.mxu0 0.0
    %65 = vmatprep.subr.mxu0 0.0
    %66 = vmatpush1.msra.mxu0 0.0
    %67 = vmatprep.subr.mxu0 0.0
    %68 = vmatpush1.msra.mxu0 0.0
    %69 = vmatprep.subr.mxu0 0.0
    %70 = vmatpush1.msra.mxu0 0.0
    %71 = vmatprep.subr.mxu0 0.0
    %72 = vmatpush1.msra.mxu0 0.0
    %73 = vmatprep.subr.mxu0 0.0
    %74 = vmatpush1.msra.mxu0 0.0
    %75 = vmatprep.subr.mxu0 0.0
    %76 = vmatpush1.msra.mxu0 0.0
    %77 = vmatprep.subr.mxu0 0.0
    %78 = vmatpush1.msra.mxu0 0.0
    %79 = vmatprep.subr.mxu0 0.0
    %80 = vmatpush1.msra.mxu0 0.0
    %81 = vmatprep.subr.mxu0 0.0
    %82 = vmatpush1.msra.mxu0 0.0
    %83 = vmatprep.subr.mxu0 0.0
    %84 = vmatpush1.msra.mxu0 0.0
    %85 = vmatprep.subr.mxu0 0.0
    %86 = vmatpush1.msra.mxu0 0.0
    %87 = vmatprep.subr.mxu0 0.0
    %88 = vmatpush1.msra.mxu0 0.0
    %89 = vmatprep.subr.mxu0 0.0
    %90 = vmatpush1.msra.mxu0 0.0
    %91 = vmatprep.subr.mxu0 0.0
    %92 = vmatpush1.msra.mxu0 0.0
    %93 = vmatprep.subr.mxu0 0.0
    %94 = vmatpush1.msra.mxu0 0.0
    %95 = vmatprep.subr.mxu0 0.0
    %96 = vmatpush1.msra.mxu0 0.0
    %97 = vmatprep.subr.mxu0 0.0
    %98 = vmatpush1.msra.mxu0 0.0
    %99 = vmatprep.subr.mxu0 0.0
    %100 = vmatpush1.msra.mxu0 0.0
    %101 = vmatprep.subr.mxu0 0.0
    %102 = vmatpush1.msra.mxu0 0.0
    %103 = vmatprep.subr.mxu0 0.0
    %104 = vmatpush1.msra.mxu0 0.0
    %105 = vmatprep.mubr.f32.mxu0 0.0
    %106 = vmatmul.mubr.f32.gmra.mrb[0].mxu0 %v36
    %v107 = vpop.f32.mrb[0].mxu0
    %v108 = vadd.f32 %v32, %v107
    %v109 = vpop.f32.mrb[0].mxu0
    %110 = vmatprep.mubr.f32.mxu0 0.0
    %111 = vmatmul.mubr.f32.gmra.mrb[0].mxu0 %v39
    %v112 = vpop.f32.mrb[0].mxu0
    %v113 = vadd.f32 %v32, %v112
    %v114 = vpop.f32.mrb[0].mxu0
    %115 = vdwg.mxu0
    %v116 = vmax.f32 %v108, 0.0
    %v117 = vmax.f32 %v113, 0.0
    %v118 = vld [vmem:[%s3] sm:$0xff]
    %v119 = vld [vmem:[%s3 + $0x8] sm:$0xff]
    %v120 = vld [vmem:[%s3 + $0x10] sm:$0xff]
    %v121 = vld [vmem:[%s3 + $0x18] sm:$0xff]
    %v122 = vld [vmem:[%s3 + $0x20] sm:$0xff]
    %v123 = vld [vmem:[%s3 + $0x28] sm:$0xff]
    %v124 = vld [vmem:[%s3 + $0x30] sm:$0xff]
    %v125 = vld [vmem:[%s3 + $0x38] sm:$0xff]
    %v126 = vld [vmem:[%s4] sm:$0x1]
    %v128 = vlaneseq
    %v129 = vshrl.u32 %v128, 7
    %v130 = vsub.s32 0, %v129
    %v131 = vrot.slane %v126, %v130
    %vm133 = vcmask 523264
    %v135 = vsel %vm133, %v116, 0
    %v138 = vsel %vm133, %v117, 0
    %140 = vmatprep.subr.mxu0 0.0
    %141 = vmatpush1.msra.mxu0 %v118
    %142 = vmatprep.subr.mxu0 0.0
    %143 = vmatpush1.msra.mxu0 %v119
    %144 = vmatprep.subr.mxu0 0.0
    %145 = vmatpush1.msra.mxu0 %v120
    %146 = vmatprep.subr.mxu0 0.0
    %147 = vmatpush1.msra.mxu0 %v121
    %148 = vmatprep.subr.mxu0 0.0
    %149 = vmatpush1.msra.mxu0 %v122
    %150 = vmatprep.subr.mxu0 0.0
    %151 = vmatpush1.msra.mxu0 %v123
    %152 = vmatprep.subr.mxu0 0.0
    %153 = vmatpush1.msra.mxu0 %v124
    %154 = vmatprep.subr.mxu0 0.0
    %155 = vmatpush1.msra.mxu0 %v125
    %156 = vmatprep.subr.mxu0 0.0
    %157 = vmatpush1.msra.mxu0 0.0
    %158 = vmatprep.subr.mxu0 0.0
    %159 = vmatpush1.msra.mxu0 0.0
    %160 = vmatprep.subr.mxu0 0.0
    %161 = vmatpush1.msra.mxu0 0.0
    %162 = vmatprep.subr.mxu0 0.0
    %163 = vmatpush1.msra.mxu0 0.0
    %164 = vmatprep.subr.mxu0 0.0
    %165 = vmatpush1.msra.mxu0 0.0
    %166 = vmatprep.subr.mxu0 0.0
    %167 = vmatpush1.msra.mxu0 0.0
    %168 = vmatprep.subr.mxu0 0.0
    %169 = vmatpush1.msra.mxu0 0.0
    %170 = vmatprep.subr.mxu0 0.0
    %171 = vmatpush1.msra.mxu0 0.0
    %172 = vmatprep.subr.mxu0 0.0
    %173 = vmatpush1.msra.mxu0 0.0
    %174 = vmatprep.subr.mxu0 0.0
    %175 = vmatpush1.msra.mxu0 0.0
    %176 = vmatprep.subr.mxu0 0.0
    %177 = vmatpush1.msra.mxu0 0.0
    %178 = vmatprep.subr.mxu0 0.0
    %179 = vmatpush1.msra.mxu0 0.0
    %180 = vmatprep.subr.mxu0 0.0
    %181 = vmatpush1.msra.mxu0 0.0
    %182 = vmatprep.subr.mxu0 0.0
    %183 = vmatpush1.msra.mxu0 0.0
    %184 = vmatprep.subr.mxu0 0.0
    %185 = vmatpush1.msra.mxu0 0.0
    %186 = vmatprep.subr.mxu0 0.0
    %187 = vmatpush1.msra.mxu0 0.0
    %188 = vmatprep.subr.mxu0 0.0
    %189 = vmatpush1.msra.mxu0 0.0
    %190 = vmatprep.subr.mxu0 0.0
    %191 = vmatpush1.msra.mxu0 0.0
    %192 = vmatprep.subr.mxu0 0.0
    %193 = vmatpush1.msra.mxu0 0.0
    %194 = vmatprep.subr.mxu0 0.0
    %195 = vmatpush1.msra.mxu0 0.0
    %196 = vmatprep.subr.mxu0 0.0
    %197 = vmatpush1.msra.mxu0 0.0
    %198 = vmatprep.subr.mxu0 0.0
    %199 = vmatpush1.msra.mxu0 0.0
    %200 = vmatprep.subr.mxu0 0.0
    %201 = vmatpush1.msra.mxu0 0.0
    %202 = vmatprep.subr.mxu0 0.0
    %203 = vmatpush1.msra.mxu0 0.0
    %204 = vmatprep.mubr.f32.mxu0 0.0
    %205 = vmatmul.mubr.f32.gmra.mrb[0].mxu0 %v135
    %v206 = vpop.f32.mrb[0].mxu0
    %v207 = vadd.f32 %v131, %v206
    %v208 = vpop.f32.mrb[0].mxu0
    %209 = vmatprep.mubr.f32.mxu0 0.0
    %210 = vmatmul.mubr.f32.gmra.mrb[0].mxu0 %v138
    %v211 = vpop.f32.mrb[0].mxu0
    %v212 = vadd.f32 %v131, %v211
    %v213 = vpop.f32.mrb[0].mxu0
    %214 = vdwg.mxu0
    %215 = vst.msk [vmem:[#allocation2] sm:$0xff] %vm34, %v207
    %216 = vst.msk [vmem:[#allocation2 + $0x8] sm:$0xff] %vm34, %v212
    // Predicated region
    $region22: #{tpu_custom_call.1} parent=1 // pred_check
      _
    $region23: #{tpu_custom_call.1} parent=1 // pred_check_branch
      %218 = sbr.rel (0) target = $region25
    $region24: #{tpu_custom_call.1} parent=1 // pred_region
      %s220 = ssub.s32 256, 256
      %221 = vsyncadd [#allocation3], %s220
      %s222 = sshll.u32 [#allocation2], 4
      %s223 = int_to_ptr.vmem [resolvable:$true] %s222
      %228 = dma.vmem_to_hbm [thread:$0]  %s223, 256, %s5, [#allocation3], 128, 128, 8
    $region25: #{tpu_custom_call.1} parent=1 // pred_fallthru
      _
    // Predicated region
    $region26: #{tpu_custom_call.1} parent=1 // pred_check
      _
    $region27: #{tpu_custom_call.1} parent=1 // pred_check_branch
      %230 = sbr.rel (0) target = $region29
    $region28: #{tpu_custom_call.1} parent=1 // pred_region
      %231 = dma.done [#allocation3], 256
    $region29: #{tpu_custom_call.1} parent=1 // pred_fallthru
      _
    %232 = vsyncpa [#allocation3], 1

</llo_original>
